<compile_context>
chip_gen: v5e
topology: v5e:2x2
jax: 0.10.0
libtpu: 0.0.40
codegen_flags: <defaults>
</compile_context>

<pallas_src>
import functools
import math

import jax
import jax.numpy as jnp
from jax.experimental import pallas as pl
from jax.experimental.pallas import tpu as pltpu

PHI = (1.0 + math.sqrt(5.0)) / 2.0

_MAX_BLOCK_ROWS = 1024          # up to (1024, 1024) f32 tile = 4 MiB
_MIN_TILES = 4                  # keep >= ~4 grid steps for v7x megacore balance
_VMEM_LIMIT = 32 * 1024 * 1024


def _partial_ssq_kernel(x_ref, part_ref, *, n_rows, block_rows, num_tiles,
                        sub_rows, needs_mask):
    """Pass 1: per-tile partial sum-of-squares of y = x*cos(PHI*x).

    Emits a (sub_rows, WIDTH) VALU-folded slab per tile.  The tiny global
    reduce + sqrt runs in plain JAX between the two pallas_calls, so this grid
    axis is 'parallel' (shards across v7x's two TensorCores).
    """
    i = pl.program_id(0)
    x = x_ref[...].astype(jnp.float32)      # in-kernel cast: bf16 streams 2 B/elem
    y = x * jnp.cos(PHI * x)
    sq = y * y

    def fold(v):
        if sub_rows == 8:
            # Pure VALU adds: fold block_rows -> 8 sublanes (no XLU reduce).
            return jnp.sum(v.reshape(block_rows // 8, 8, v.shape[-1]), axis=0)
        # Tiny tensors: block_rows == n_rows < 8.
        return jnp.sum(v, axis=0, keepdims=True)

    if needs_mask:
        # Only the last tile is ragged; full tiles skip the mask entirely.
        @pl.when(i == num_tiles - 1)
        def _ragged():
            row = jax.lax.broadcasted_iota(jnp.int32, sq.shape, 0)
            valid = n_rows - i * block_rows
            part_ref[...] = fold(jnp.where(row < valid, sq, 0.0))[None]

        @pl.when(i != num_tiles - 1)
        def _full():
            part_ref[...] = fold(sq)[None]
    else:
        part_ref[...] = fold(sq)[None]


def _apply_scale_kernel(scale_ref, x_ref, o_ref):
    """Pass 2: recompute y tile-wise, apply the global scalar scale, store in
    the caller's dtype.  OOB rows of a ragged last block are dropped by Pallas."""
    x = x_ref[...].astype(jnp.float32)
    y = x * jnp.cos(PHI * x)
    o_ref[...] = (y * scale_ref[0, 0]).astype(o_ref.dtype)
    # TODO(synk): on v7x, A/B a materialize-y variant (pass 1 writes y, pass 2
    # only rescales) if a bundle dump shows the double cos makes this VALU-bound;
    # keep recompute-y on HBM-bound v5e/v6e.


def _pick_width(n):
    for w in (1024, 512, 256, 128):
        if n % w == 0:
            return w
    return None


@jax.jit
def _spiral_gate_impl(x, drift):
    orig_shape = x.shape
    orig_dtype = x.dtype
    xf = x.reshape(-1)                      # original dtype; cast happens in-kernel
    n = xf.shape[0]

    width = _pick_width(n)
    padded_n = n
    if width is None:
        # Rare fallback: numel not a multiple of 128.  Zero padding keeps the
        # norm exact (y == 0 on padded elements); tail is sliced off afterwards.
        width = 128
        padded_n = ((n + width - 1) // width) * width
        xf = jnp.pad(xf, (0, padded_n - n))
    rows = padded_n // width
    x2d = xf.reshape(rows, width)

    # Row granularity: 8 for 4-byte dtypes, 16 for bf16/fp16, 32 for 1-byte.
    itemsize = int(jnp.dtype(orig_dtype).itemsize)
    gran = max(8, 32 // max(itemsize, 1))

    block_rows = min(rows, _MAX_BLOCK_ROWS, max(gran, rows // _MIN_TILES))
    if block_rows >= gran:
        block_rows -= block_rows % gran
    block_rows = max(block_rows, 1)
    num_tiles = pl.cdiv(rows, block_rows)
    needs_mask = (rows % block_rows) != 0
    sub_rows = 8 if block_rows % 8 == 0 else 1

    x_spec = pl.BlockSpec((block_rows, width), lambda i: (i, 0))
    smem_spec = pl.BlockSpec(memory_space=pltpu.MemorySpace.SMEM)

    # Pass 1: per-tile partial sums of squares (parallel -> both TCs on v7x).
    partials = pl.pallas_call(
        functools.partial(_partial_ssq_kernel, n_rows=rows,
                          block_rows=block_rows, num_tiles=num_tiles,
                          sub_rows=sub_rows, needs_mask=needs_mask),
        out_shape=jax.ShapeDtypeStruct((num_tiles, sub_rows, width), jnp.float32),
        grid=(num_tiles,),
        in_specs=[x_spec],
        out_specs=pl.BlockSpec((1, sub_rows, width), lambda i: (i, 0, 0)),
        compiler_params=pltpu.CompilerParams(
            dimension_semantics=("parallel",),
            vmem_limit_bytes=_VMEM_LIMIT),
    )(x2d)

    # Tiny follow-up reduce + scale in plain JAX (sub-microsecond).
    ssq = jnp.sum(partials)
    norm = jnp.sqrt(ssq)
    drift_f = jnp.asarray(drift, jnp.float32)
    scale = jnp.where(norm == 0.0, jnp.float32(1.0), drift_f / norm)
    scale = scale.reshape(1, 1).astype(jnp.float32)

    # Pass 2: recompute y and rescale; independent tiles -> "parallel".
    out2d = pl.pallas_call(
        _apply_scale_kernel,
        out_shape=jax.ShapeDtypeStruct((rows, width), orig_dtype),
        grid=(num_tiles,),
        in_specs=[smem_spec, x_spec],
        out_specs=x_spec,
        compiler_params=pltpu.CompilerParams(
            dimension_semantics=("parallel",),
            vmem_limit_bytes=_VMEM_LIMIT),
    )(scale, x2d)

    out = out2d.reshape(-1)
    if padded_n != n:
        out = out[:n]
    return out.reshape(orig_shape)


def spiral_gate(x: jax.Array, drift: float = 0.618) -> jax.Array:
    """SpiralGate forward: y = x*cos(PHI*x); out = y / ||y||_F * drift (y if ||y||==0)."""
    return _spiral_gate_impl(x, drift)


def _reference(x, drift=0.618):
    xf = x.astype(jnp.float32)
    y = xf * jnp.cos(PHI * xf)
    norm = jnp.sqrt(jnp.sum(y * y))
    out = jnp.where(norm == 0.0, y, y / norm * drift)
    return out.astype(x.dtype)


if __name__ == "__main__":
    key = jax.random.PRNGKey(0)
    drift = 0.618

    # Small NCHW tensor consistent with a conv-style flow.
    x_small = jax.random.normal(key, (2, 4, 16, 16), dtype=jnp.float32)
    out_small = spiral_gate(x_small, drift)
    jax.block_until_ready(out_small)
    assert out_small.shape == x_small.shape and out_small.dtype == x_small.dtype
    assert jnp.allclose(out_small, _reference(x_small, drift), atol=1e-6, rtol=1e-4)

    k1, k2, k3 = jax.random.split(key, 3)

    # Multi-tile path: 1024 rows -> 4 grid tiles of 256 rows, per-tile partials.
    x_big = jax.random.normal(k1, (8, 16, 128, 64), dtype=jnp.float32)
    out_big = spiral_gate(x_big, drift)
    jax.block_until_ready(out_big)
    assert jnp.allclose(out_big, _reference(x_big, drift), atol=1e-6, rtol=2e-4)

    # Ragged row count: 600 rows -> partial last grid block, last-tile-only mask.
    x_ragged = jax.random.normal(k2, (600, 1024), dtype=jnp.float32)
    out_ragged = spiral_gate(x_ragged, drift)
    jax.block_until_ready(out_ragged)
    assert jnp.allclose(out_ragged, _reference(x_ragged, drift), atol=1e-6, rtol=2e-4)

    # bf16 path: exercises the in-kernel cast (x streamed at 2 B/elem).
    x_bf16 = jax.random.normal(k3, (4, 8, 32, 32), dtype=jnp.bfloat16)
    out_bf16 = spiral_gate(x_bf16, drift)
    jax.block_until_ready(out_bf16)
    assert out_bf16.dtype == jnp.bfloat16
    assert jnp.allclose(out_bf16.astype(jnp.float32),
                        _reference(x_bf16, drift).astype(jnp.float32),
                        atol=1e-5, rtol=2e-2)

    print("KERNEL_OK")
</pallas_src>

<mosaic_0001>
module attributes {stable_mosaic.version = 11 : i64} {
  func.func @_apply_scale_kernel(%arg0: i32, %arg1: memref<1x1xf32, #tpu.memory_space<smem>>, %arg2: memref<2x1024xf32, #tpu.memory_space<vmem>>, %arg3: memref<2x1024xf32, #tpu.memory_space<vmem>>) attributes {dimension_semantics = [#tpu.dimension_semantics<parallel>], iteration_bounds = array<i64: 1>, scalar_prefetch = 0 : i64, scratch_operands = 0 : i64, tpu.core_type = #tpu.core_type<tc>, window_params = [{transform_indices = @transform_0, window_bounds = array<i64: 1, 1>}, {transform_indices = @transform_1, window_bounds = array<i64: 2, 1024>}, {transform_indices = @transform_2, window_bounds = array<i64: 2, 1024>}]} {
    %c0 = arith.constant 0 : index
    %c0_0 = arith.constant 0 : index
    %0 = vector.load %arg2[%c0, %c0_0] : memref<2x1024xf32, #tpu.memory_space<vmem>>, vector<2x1024xf32>
    %cst = arith.constant 1.61803401 : f32
    %1 = vector.broadcast %cst : f32 to vector<2x1024xf32>
    %2 = arith.mulf %1, %0 : vector<2x1024xf32>
    %3 = math.cos %2 : vector<2x1024xf32>
    %4 = arith.mulf %0, %3 : vector<2x1024xf32>
    %c0_1 = arith.constant 0 : index
    %c0_2 = arith.constant 0 : index
    %5 = memref.load %arg1[%c0_1, %c0_2] : memref<1x1xf32, #tpu.memory_space<smem>>
    %6 = vector.broadcast %5 : f32 to vector<2x1024xf32>
    %7 = arith.mulf %4, %6 : vector<2x1024xf32>
    %c0_3 = arith.constant 0 : index
    %c0_4 = arith.constant 0 : index
    %8 = vector.load %arg3[%c0_3, %c0_4] : memref<2x1024xf32, #tpu.memory_space<vmem>>, vector<2x1024xf32>
    tpu.vector_store %arg3[%c0_3, %c0_4], %7 {strides = array<i32>} : memref<2x1024xf32, #tpu.memory_space<vmem>>, vector<2x1024xf32>,
    return
  }
  func.func @transform_0(%arg0: i32) -> (i32, i32) {
    %c0_i32 = arith.constant 0 : i32
    %c0_i32_0 = arith.constant 0 : i32
    %c0_i32_1 = arith.constant 0 : i32
    return %c0_i32, %c0_i32_0 : i32, i32
  }
  func.func @transform_1(%arg0: i32) -> (i32, i32) {
    %c0_i32 = arith.constant 0 : i32
    %c0_i32_0 = arith.constant 0 : i32
    return %arg0, %c0_i32 : i32, i32
  }
  func.func @transform_2(%arg0: i32) -> (i32, i32) {
    %c0_i32 = arith.constant 0 : i32
    %c0_i32_0 = arith.constant 0 : i32
    return %arg0, %c0_i32 : i32, i32
  }
}

module attributes {stable_mosaic.version = 11 : i64} {
  func.func @_partial_ssq_kernel(%arg0: i32, %arg1: memref<2x1024xf32, #tpu.memory_space<vmem>>, %arg2: memref<1x1x1024xf32, #tpu.memory_space<vmem>>) attributes {dimension_semantics = [#tpu.dimension_semantics<parallel>], iteration_bounds = array<i64: 1>, scalar_prefetch = 0 : i64, scratch_operands = 0 : i64, tpu.core_type = #tpu.core_type<tc>, window_params = [{transform_indices = @transform_0, window_bounds = array<i64: 2, 1024>}, {transform_indices = @transform_1, window_bounds = array<i64: 1, 1, 1024>}]} {
    %c0 = arith.constant 0 : index
    %c0_0 = arith.constant 0 : index
    %0 = vector.load %arg1[%c0, %c0_0] : memref<2x1024xf32, #tpu.memory_space<vmem>>, vector<2x1024xf32>
    %cst = arith.constant 1.61803401 : f32
    %1 = vector.broadcast %cst : f32 to vector<2x1024xf32>
    %2 = arith.mulf %1, %0 : vector<2x1024xf32>
    %3 = math.cos %2 : vector<2x1024xf32>
    %4 = arith.mulf %0, %3 : vector<2x1024xf32>
    %5 = arith.mulf %4, %4 : vector<2x1024xf32>
    %cst_1 = arith.constant dense<0.000000e+00> : vector<1024xf32>
    %6 = vector.multi_reduction <add>, %5, %cst_1 [0] : vector<2x1024xf32> to vector<1024xf32>
    %7 = vector.shape_cast %6 : vector<1024xf32> to vector<1x1024xf32>
    %8 = vector.shape_cast %7 : vector<1x1024xf32> to vector<1x1x1024xf32>
    %c0_2 = arith.constant 0 : index
    %c0_3 = arith.constant 0 : index
    %c0_4 = arith.constant 0 : index
    %9 = vector.load %arg2[%c0_2, %c0_3, %c0_4] : memref<1x1x1024xf32, #tpu.memory_space<vmem>>, vector<1x1x1024xf32>
    tpu.vector_store %arg2[%c0_2, %c0_3, %c0_4], %8 {strides = array<i32>} : memref<1x1x1024xf32, #tpu.memory_space<vmem>>, vector<1x1x1024xf32>,
    return
  }
  func.func @transform_0(%arg0: i32) -> (i32, i32) {
    %c0_i32 = arith.constant 0 : i32
    %c0_i32_0 = arith.constant 0 : i32
    return %arg0, %c0_i32 : i32, i32
  }
  func.func @transform_1(%arg0: i32) -> (i32, i32, i32) {
    %c0_i32 = arith.constant 0 : i32
    %c0_i32_0 = arith.constant 0 : i32
    %c0_i32_1 = arith.constant 0 : i32
    return %arg0, %c0_i32, %c0_i32_0 : i32, i32, i32
  }
}

</mosaic_0001>

<llo_original>
// kernel: _spiral_gate_impl.3
$region0: #{_spiral_gate_impl.3}
  #allocation0 [shape = 'u32[]', space=smem, size = 0x4, offset = 0x4, fixed_abs, tag = 'smem constant byte address 0x4 - core index']
  #allocation1 [shape = 'u32[72,128]{1,0:T(1,128)}', space=vmem, size = 0x9000, scoped, tag = 'internal scratch']
  #allocation2 [shape = 'f32[1,1]{1,0:T(1,128)S(6)}', space=smem, size = 0x200, scoped, tag = 'scoped memory for _spiral_gate_impl.3']
  %s0 = inlined_call_operand.<no memory space> [shape: f32[1,1], index: 0, kind: input, shape index: {}]
  %s1 = inlined_call_operand.vmem [shape: f32[2,1024], index: 1, kind: input, shape index: {}]
  %s2 = inlined_call_operand.vmem [shape: f32[2,1024], index: 2, kind: output, shape index: {}]
  %s3 = sld [smem:[#allocation0]]
  $region18: #{_spiral_gate_impl.3} parent=0
    _
  %s5 = ssub.s32 1, %s3
  %s6 = scalar_select 0, %s5, %s3
  %7 = sst [smem:[#allocation2]] %s0
  // Predicated region
  $region2: #{_spiral_gate_impl.3} parent=0 // pred_check
    _
  $region3: #{_spiral_gate_impl.3} parent=0 // pred_check_branch
    %9 = sbr.rel (0) target = $region5
  $region4: #{_spiral_gate_impl.3} parent=0 // pred_region
    _
  $region5: #{_spiral_gate_impl.3} parent=0 // pred_fallthru
    _
  // Predicated region
  $region6: #{_spiral_gate_impl.3} parent=0 // pred_check
    _
  $region7: #{_spiral_gate_impl.3} parent=0 // pred_check_branch
    %11 = sbr.rel (0) target = $region9
  $region8: #{_spiral_gate_impl.3} parent=0 // pred_region
    _
  $region9: #{_spiral_gate_impl.3} parent=0 // pred_fallthru
    _
  %v12 = vld [vmem:[%s1] sm:$0xff]
  %v13 = vld [vmem:[%s1 + $0x8] sm:$0xff]
  %v14 = vmul.f32 %v12, 1.618034
  %v15 = vmul.f32 %v13, 1.618034
  %v16 = vand.u32 2147483647, %v14
  %vm17 = vcmp.le.f32.partialorder %v16, 0.7853982
  %vm18 = vcmp.lt.s32.totalorder %v14, 0
  %v19 = vand.u32 %v14, 2139095040
  %v20 = vshrl.u32 %v19, 23
  %v21 = vsub.s32 %v20, 127
  %v22 = vand.u32 2147483647, %v14
  %v23 = vand.u32 %v22, 8388607
  %v24 = vor.u32 %v23, 8388608
  %v25 = vsub.s32 0, %v24
  %v26 = vadd.s32 %v21, 1
  %vm27 = vcmp.gt.s32.totalorder %v26, 0
  %v28 = vsel %vm27, %v26, 0
  %v29 = vshrl.u32 %v28, 5
  %v30 = vand.u32 %v28, 31
  %v31 = vsub.s32 32, %v30
  %v32 = vshrl.u32 683565275, %v31
  %v33 = vshll.u32 683565275, %v30
  %v34 = vshrl.u32 2475754826, %v31
  %v35 = vor.u32 %v33, %v34
  %v36 = vshll.u32 2475754826, %v30
  %v37 = vshrl.u32 2131351028, %v31
  %v38 = vor.u32 %v36, %v37
  %v39 = vshll.u32 2131351028, %v30
  %v40 = vshrl.u32 2102212464, %v31
  %v41 = vor.u32 %v39, %v40
  %v42 = vshll.u32 2102212464, %v30
  %v43 = vshrl.u32 920167782, %v31
  %v44 = vor.u32 %v42, %v43
  %v45 = vshll.u32 920167782, %v30
  %v46 = vshrl.u32 1326507024, %v31
  %v47 = vor.u32 %v45, %v46
  %vm48 = vcmp.lt.s32.totalorder %v29, 1
  %vm49 = vcmp.lt.s32.totalorder %v29, 2
  %vm50 = vcmp.lt.s32.totalorder %v29, 3
  %vm51 = vcmp.lt.s32.totalorder %v29, 4
  %v52 = vsel %vm48, %v32, %v35
  %v53 = vsel %vm51, %v41, 2102212464
  %v54 = vsel %vm50, %v38, %v53
  %v55 = vsel %vm49, %v52, %v54
  %v56 = vsel %vm48, %v35, %v38
  %v57 = vsel %vm51, %v44, 920167782
  %v58 = vsel %vm50, %v41, %v57
  %v59 = vsel %vm49, %v56, %v58
  %v60 = vsel %vm48, %v38, %v41
  %v61 = vsel %vm51, %v47, 1326507024
  %v62 = vsel %vm50, %v44, %v61
  %v63 = vsel %vm49, %v60, %v62
  %v64 = vshll.u32 %v24, 8
  %v65 = vand.u32 %v64, 65535
  %v66 = vshrl.u32 %v64, 16
  %v67 = vand.u32 %v63, 65535
  %v68 = vshrl.u32 %v63, 16
  %v69 = vmul.u32 %v65, %v67
  %v70 = vmul.u32 %v65, %v68
  %v71 = vmul.u32 %v66, %v67
  %v72 = vmul.u32 %v66, %v68
  %v73 = vshll.u32 %v70, 16
  %v74 = vshrl.u32 %v70, 16
  %v75 = vshll.u32 %v71, 16
  %v76 = vshrl.u32 %v71, 16
  %vm77 = vc.u32 %v69, %v73
  %v78 = vsel %vm77, 1, 0
  %v79 = vadd.s32 %v69, %v73
  %v80 = vadd.s32 %v72, %v78
  %vm81 = vc.u32 %v79, %v75
  %v82 = vsel %vm81, 1, 0
  %v83 = vadd.s32 %v79, %v75
  %v84 = vadd.s32 %v80, %v82
  %v85 = vadd.s32 %v84, %v74
  %v86 = vadd.s32 %v85, %v76
  %v87 = vand.u32 %v64, 65535
  %v88 = vshrl.u32 %v64, 16
  %v89 = vand.u32 %v59, 65535
  %v90 = vshrl.u32 %v59, 16
  %v91 = vmul.u32 %v87, %v89
  %v92 = vmul.u32 %v87, %v90
  %v93 = vmul.u32 %v88, %v89
  %v94 = vmul.u32 %v88, %v90
  %v95 = vshll.u32 %v92, 16
  %v96 = vshrl.u32 %v92, 16
  %v97 = vshll.u32 %v93, 16
  %v98 = vshrl.u32 %v93, 16
  %vm99 = vc.u32 %v91, %v95
  %v100 = vsel %vm99, 1, 0
  %v101 = vadd.s32 %v91, %v95
  %v102 = vadd.s32 %v94, %v100
  %vm103 = vc.u32 %v101, %v97
  %v104 = vsel %vm103, 1, 0
  %v105 = vadd.s32 %v101, %v97
  %v106 = vadd.s32 %v102, %v104
  %v107 = vadd.s32 %v106, %v96
  %v108 = vadd.s32 %v107, %v98
  %v109 = vmul.u32 %v64, %v55
  %v110 = vadd.s32 %v86, %v105
  %vm111 = vc.u32 %v86, %v105
  %v112 = vadd.s32 %v108, 1
  %v113 = vsel %vm111, %v112, %v108
  %v114 = vadd.s32 %v109, %v113
  %v115 = vadd.s32 %v114, 536870912
  %v116 = vshrl.u32 %v115, 30
  %v117 = vshll.u32 %v116, 30
  %v118 = vsub.s32 %v114, %v117
  %vm119 = vcmp.lt.s32.totalorder %v118, 0
  %v120 = vsub.s32 0, %v118
  %v121 = vsel %vm119, %v120, %v118
  %v122 = vclz %v121
  %v123 = vsub.s32 %v122, 2
  %vm124 = vcmp.gt.s32.totalorder 0, %v123
  %v125 = vsel %vm124, 0, %v123
  %v126 = vsub.s32 32, %v125
  %v127 = vshll.u32 %v118, %v125
  %v128 = vshrl.u32 %v110, %v126
  %v129 = vor.u32 %v127, %v128
  %v130 = vsub.s32 4294967266, %v125
  %v131 = vadd.s32 %v130, 127
  %v132 = vshll.u32 %v131, 23
  %v133 = vor.u32 4788187, %v132
  %v134 = vand.u32 2147483647, %v133
  %v136 = vcvt.s32.f32 %v129
  %v137 = vmul.f32 %v136, %v134
  %v138 = vxor.u32 %v137, 2147483648
  %v139 = vsel %vm18, %v138, %v137
  %v140 = vsub.s32 4, %v116
  %v141 = vsel %vm18, %v140, %v116
  %v142 = vsel %vm17, %v14, %v139
  %v143 = vsel %vm17, 0, %v141
  %v144 = vmul.f32 %v142, %v142
  %v145 = vmul.f32 %v144, -0.001358992
  %v146 = vadd.f32 %v145, 0.041655596
  %v147 = vmul.f32 %v144, %v146
  %v148 = vadd.f32 %v147, -0.4999988
  %v149 = vmul.f32 %v144, %v148
  %v150 = vadd.f32 1.0, %v149
  %v151 = vmul.f32 %v142, %v142
  %v152 = vmul.f32 %v151, -0.00019511016
  %v153 = vadd.f32 %v152, 0.008332121
  %v154 = vmul.f32 %v151, %v153
  %v155 = vadd.f32 %v154, -0.16666654
  %v156 = vmul.f32 %v151, %v155
  %v157 = vadd.f32 %v156, 1.0
  %v158 = vmul.f32 %v157, %v142
  %vm159 = vweird.f32 %v14
  %v160 = vand.u32 %v143, 3
  %vm161 = vcmp.lt.s32.totalorder %v160, 2
  %vm162 = vcmp.eq.s32.totalorder %v160, 0
  %v163 = vxor.u32 %v158, 2147483648
  %v164 = vsel %vm162, %v150, %v163
  %vm165 = vcmp.eq.s32.totalorder %v160, 2
  %v166 = vxor.u32 %v150, 2147483648
  %v167 = vsel %vm165, %v166, %v158
  %v168 = vsel %vm161, %v164, %v167
  %v169 = vsel %vm159, nan, %v168
  %v170 = vand.u32 2147483647, %v15
  %vm171 = vcmp.le.f32.partialorder %v170, 0.7853982
  %vm172 = vcmp.lt.s32.totalorder %v15, 0
  %v173 = vand.u32 %v15, 2139095040
  %v174 = vshrl.u32 %v173, 23
  %v175 = vsub.s32 %v174, 127
  %v176 = vand.u32 2147483647, %v15
  %v177 = vand.u32 %v176, 8388607
  %v178 = vor.u32 %v177, 8388608
  %v179 = vsub.s32 0, %v178
  %v180 = vadd.s32 %v175, 1
  %vm181 = vcmp.gt.s32.totalorder %v180, 0
  %v182 = vsel %vm181, %v180, 0
  %v183 = vshrl.u32 %v182, 5
  %v184 = vand.u32 %v182, 31
  %v185 = vsub.s32 32, %v184
  %v186 = vshrl.u32 683565275, %v185
  %v187 = vshll.u32 683565275, %v184
  %v188 = vshrl.u32 2475754826, %v185
  %v189 = vor.u32 %v187, %v188
  %v190 = vshll.u32 2475754826, %v184
  %v191 = vshrl.u32 2131351028, %v185
  %v192 = vor.u32 %v190, %v191
  %v193 = vshll.u32 2131351028, %v184
  %v194 = vshrl.u32 2102212464, %v185
  %v195 = vor.u32 %v193, %v194
  %v196 = vshll.u32 2102212464, %v184
  %v197 = vshrl.u32 920167782, %v185
  %v198 = vor.u32 %v196, %v197
  %v199 = vshll.u32 920167782, %v184
  %v200 = vshrl.u32 1326507024, %v185
  %v201 = vor.u32 %v199, %v200
  %vm202 = vcmp.lt.s32.totalorder %v183, 1
  %vm203 = vcmp.lt.s32.totalorder %v183, 2
  %vm204 = vcmp.lt.s32.totalorder %v183, 3
  %vm205 = vcmp.lt.s32.totalorder %v183, 4
  %v206 = vsel %vm202, %v186, %v189
  %v207 = vsel %vm205, %v195, 2102212464
  %v208 = vsel %vm204, %v192, %v207
  %v209 = vsel %vm203, %v206, %v208
  %v210 = vsel %vm202, %v189, %v192
  %v211 = vsel %vm205, %v198, 920167782
  %v212 = vsel %vm204, %v195, %v211
  %v213 = vsel %vm203, %v210, %v212
  %v214 = vsel %vm202, %v192, %v195
  %v215 = vsel %vm205, %v201, 1326507024
  %v216 = vsel %vm204, %v198, %v215
  %v217 = vsel %vm203, %v214, %v216
  %v218 = vshll.u32 %v178, 8
  %v219 = vand.u32 %v218, 65535
  %v220 = vshrl.u32 %v218, 16
  %v221 = vand.u32 %v217, 65535
  %v222 = vshrl.u32 %v217, 16
  %v223 = vmul.u32 %v219, %v221
  %v224 = vmul.u32 %v219, %v222
  %v225 = vmul.u32 %v220, %v221
  %v226 = vmul.u32 %v220, %v222
  %v227 = vshll.u32 %v224, 16
  %v228 = vshrl.u32 %v224, 16
  %v229 = vshll.u32 %v225, 16
  %v230 = vshrl.u32 %v225, 16
  %vm231 = vc.u32 %v223, %v227
  %v232 = vsel %vm231, 1, 0
  %v233 = vadd.s32 %v223, %v227
  %v234 = vadd.s32 %v226, %v232
  %vm235 = vc.u32 %v233, %v229
  %v236 = vsel %vm235, 1, 0
  %v237 = vadd.s32 %v233, %v229
  %v238 = vadd.s32 %v234, %v236
  %v239 = vadd.s32 %v238, %v228
  %v240 = vadd.s32 %v239, %v230
  %v241 = vand.u32 %v218, 65535
  %v242 = vshrl.u32 %v218, 16
  %v243 = vand.u32 %v213, 65535
  %v244 = vshrl.u32 %v213, 16
  %v245 = vmul.u32 %v241, %v243
  %v246 = vmul.u32 %v241, %v244
  %v247 = vmul.u32 %v242, %v243
  %v248 = vmul.u32 %v242, %v244
  %v249 = vshll.u32 %v246, 16
  %v250 = vshrl.u32 %v246, 16
  %v251 = vshll.u32 %v247, 16
  %v252 = vshrl.u32 %v247, 16
  %vm253 = vc.u32 %v245, %v249
  %v254 = vsel %vm253, 1, 0
  %v255 = vadd.s32 %v245, %v249
  %v256 = vadd.s32 %v248, %v254
  %vm257 = vc.u32 %v255, %v251
  %v258 = vsel %vm257, 1, 0
  %v259 = vadd.s32 %v255, %v251
  %v260 = vadd.s32 %v256, %v258
  %v261 = vadd.s32 %v260, %v250
  %v262 = vadd.s32 %v261, %v252
  %v263 = vmul.u32 %v218, %v209
  %v264 = vadd.s32 %v240, %v259
  %vm265 = vc.u32 %v240, %v259
  %v266 = vadd.s32 %v262, 1
  %v267 = vsel %vm265, %v266, %v262
  %v268 = vadd.s32 %v263, %v267
  %v269 = vadd.s32 %v268, 536870912
  %v270 = vshrl.u32 %v269, 30
  %v271 = vshll.u32 %v270, 30
  %v272 = vsub.s32 %v268, %v271
  %vm273 = vcmp.lt.s32.totalorder %v272, 0
  %v274 = vsub.s32 0, %v272
  %v275 = vsel %vm273, %v274, %v272
  %v276 = vclz %v275
  %v277 = vsub.s32 %v276, 2
  %vm278 = vcmp.gt.s32.totalorder 0, %v277
  %v279 = vsel %vm278, 0, %v277
  %v280 = vsub.s32 32, %v279
  %v281 = vshll.u32 %v272, %v279
  %v282 = vshrl.u32 %v264, %v280
  %v283 = vor.u32 %v281, %v282
  %v284 = vsub.s32 4294967266, %v279
  %v285 = vadd.s32 %v284, 127
  %v286 = vshll.u32 %v285, 23
  %v287 = vor.u32 4788187, %v286
  %v288 = vand.u32 2147483647, %v287
  %v290 = vcvt.s32.f32 %v283
  %v291 = vmul.f32 %v290, %v288
  %v292 = vxor.u32 %v291, 2147483648
  %v293 = vsel %vm172, %v292, %v291
  %v294 = vsub.s32 4, %v270
  %v295 = vsel %vm172, %v294, %v270
  %v296 = vsel %vm171, %v15, %v293
  %v297 = vsel %vm171, 0, %v295
  %v298 = vmul.f32 %v296, %v296
  %v299 = vmul.f32 %v298, -0.001358992
  %v300 = vadd.f32 %v299, 0.041655596
  %v301 = vmul.f32 %v298, %v300
  %v302 = vadd.f32 %v301, -0.4999988
  %v303 = vmul.f32 %v298, %v302
  %v304 = vadd.f32 1.0, %v303
  %v305 = vmul.f32 %v296, %v296
  %v306 = vmul.f32 %v305, -0.00019511016
  %v307 = vadd.f32 %v306, 0.008332121
  %v308 = vmul.f32 %v305, %v307
  %v309 = vadd.f32 %v308, -0.16666654
  %v310 = vmul.f32 %v305, %v309
  %v311 = vadd.f32 %v310, 1.0
  %v312 = vmul.f32 %v311, %v296
  %vm313 = vweird.f32 %v15
  %v314 = vand.u32 %v297, 3
  %vm315 = vcmp.lt.s32.totalorder %v314, 2
  %vm316 = vcmp.eq.s32.totalorder %v314, 0
  %v317 = vxor.u32 %v312, 2147483648
  %v318 = vsel %vm316, %v304, %v317
  %vm319 = vcmp.eq.s32.totalorder %v314, 2
  %v320 = vxor.u32 %v304, 2147483648
  %v321 = vsel %vm319, %v320, %v312
  %v322 = vsel %vm315, %v318, %v321
  %v323 = vsel %vm313, nan, %v322
  %v324 = vmul.f32 %v12, %v169
  %v325 = vmul.f32 %v13, %v323
  %s326 = sld [smem:[#allocation2]]
  %v327 = vstv %s326
  %v328 = vmul.f32 %v324, %v327
  %v329 = vmul.f32 %v325, %v327
  %330 = vst [vmem:[%s2] sm:$0xff] %v328
  %331 = vst [vmem:[%s2 + $0x8] sm:$0xff] %v329
  // Predicated region
  $region10: #{_spiral_gate_impl.3} parent=0 // pred_check
    _
  $region11: #{_spiral_gate_impl.3} parent=0 // pred_check_branch
    %333 = sbr.rel (0) target = $region13
  $region12: #{_spiral_gate_impl.3} parent=0 // pred_region
    _
  $region13: #{_spiral_gate_impl.3} parent=0 // pred_fallthru
    _
  // Predicated region
  $region14: #{_spiral_gate_impl.3} parent=0 // pred_check
    _
  $region15: #{_spiral_gate_impl.3} parent=0 // pred_check_branch
    %335 = sbr.rel (0) target = $region17
  $region16: #{_spiral_gate_impl.3} parent=0 // pred_region
    _
  $region17: #{_spiral_gate_impl.3} parent=0 // pred_fallthru
    _

// kernel: _spiral_gate_impl.2
$region0: #{_spiral_gate_impl.2}
  #allocation0 [shape = 'u32[]', space=smem, size = 0x4, offset = 0x4, fixed_abs, tag = 'smem constant byte address 0x4 - core index']
  #allocation1 [shape = 'u32[72,128]{1,0:T(1,128)}', space=vmem, size = 0x9000, scoped, tag = 'internal scratch']
  %s0 = inlined_call_operand.vmem [shape: f32[2,1024], index: 0, kind: input, shape index: {}]
  %s1 = inlined_call_operand.vmem [shape: f32[1,1,1024], index: 1, kind: output, shape index: {}]
  %s2 = sld [smem:[#allocation0]]
  $region14: #{_spiral_gate_impl.2} parent=0
    _
  %s4 = ssub.s32 1, %s2
  %s5 = scalar_select 0, %s4, %s2
  // Predicated region
  $region2: #{_spiral_gate_impl.2} parent=0 // pred_check
    _
  $region3: #{_spiral_gate_impl.2} parent=0 // pred_check_branch
    %7 = sbr.rel (0) target = $region5
  $region4: #{_spiral_gate_impl.2} parent=0 // pred_region
    _
  $region5: #{_spiral_gate_impl.2} parent=0 // pred_fallthru
    _
  %v8 = vld [vmem:[%s0] sm:$0xff]
  %v9 = vld [vmem:[%s0 + $0x8] sm:$0xff]
  %v10 = vmul.f32 %v8, 1.618034
  %v11 = vmul.f32 %v9, 1.618034
  %v12 = vand.u32 2147483647, %v10
  %vm13 = vcmp.le.f32.partialorder %v12, 0.7853982
  %vm14 = vcmp.lt.s32.totalorder %v10, 0
  %v15 = vand.u32 %v10, 2139095040
  %v16 = vshrl.u32 %v15, 23
  %v17 = vsub.s32 %v16, 127
  %v18 = vand.u32 2147483647, %v10
  %v19 = vand.u32 %v18, 8388607
  %v20 = vor.u32 %v19, 8388608
  %v21 = vsub.s32 0, %v20
  %v22 = vadd.s32 %v17, 1
  %vm23 = vcmp.gt.s32.totalorder %v22, 0
  %v24 = vsel %vm23, %v22, 0
  %v25 = vshrl.u32 %v24, 5
  %v26 = vand.u32 %v24, 31
  %v27 = vsub.s32 32, %v26
  %v28 = vshrl.u32 683565275, %v27
  %v29 = vshll.u32 683565275, %v26
  %v30 = vshrl.u32 2475754826, %v27
  %v31 = vor.u32 %v29, %v30
  %v32 = vshll.u32 2475754826, %v26
  %v33 = vshrl.u32 2131351028, %v27
  %v34 = vor.u32 %v32, %v33
  %v35 = vshll.u32 2131351028, %v26
  %v36 = vshrl.u32 2102212464, %v27
  %v37 = vor.u32 %v35, %v36
  %v38 = vshll.u32 2102212464, %v26
  %v39 = vshrl.u32 920167782, %v27
  %v40 = vor.u32 %v38, %v39
  %v41 = vshll.u32 920167782, %v26
  %v42 = vshrl.u32 1326507024, %v27
  %v43 = vor.u32 %v41, %v42
  %vm44 = vcmp.lt.s32.totalorder %v25, 1
  %vm45 = vcmp.lt.s32.totalorder %v25, 2
  %vm46 = vcmp.lt.s32.totalorder %v25, 3
  %vm47 = vcmp.lt.s32.totalorder %v25, 4
  %v48 = vsel %vm44, %v28, %v31
  %v49 = vsel %vm47, %v37, 2102212464
  %v50 = vsel %vm46, %v34, %v49
  %v51 = vsel %vm45, %v48, %v50
  %v52 = vsel %vm44, %v31, %v34
  %v53 = vsel %vm47, %v40, 920167782
  %v54 = vsel %vm46, %v37, %v53
  %v55 = vsel %vm45, %v52, %v54
  %v56 = vsel %vm44, %v34, %v37
  %v57 = vsel %vm47, %v43, 1326507024
  %v58 = vsel %vm46, %v40, %v57
  %v59 = vsel %vm45, %v56, %v58
  %v60 = vshll.u32 %v20, 8
  %v61 = vand.u32 %v60, 65535
  %v62 = vshrl.u32 %v60, 16
  %v63 = vand.u32 %v59, 65535
  %v64 = vshrl.u32 %v59, 16
  %v65 = vmul.u32 %v61, %v63
  %v66 = vmul.u32 %v61, %v64
  %v67 = vmul.u32 %v62, %v63
  %v68 = vmul.u32 %v62, %v64
  %v69 = vshll.u32 %v66, 16
  %v70 = vshrl.u32 %v66, 16
  %v71 = vshll.u32 %v67, 16
  %v72 = vshrl.u32 %v67, 16
  %vm73 = vc.u32 %v65, %v69
  %v74 = vsel %vm73, 1, 0
  %v75 = vadd.s32 %v65, %v69
  %v76 = vadd.s32 %v68, %v74
  %vm77 = vc.u32 %v75, %v71
  %v78 = vsel %vm77, 1, 0
  %v79 = vadd.s32 %v75, %v71
  %v80 = vadd.s32 %v76, %v78
  %v81 = vadd.s32 %v80, %v70
  %v82 = vadd.s32 %v81, %v72
  %v83 = vand.u32 %v60, 65535
  %v84 = vshrl.u32 %v60, 16
  %v85 = vand.u32 %v55, 65535
  %v86 = vshrl.u32 %v55, 16
  %v87 = vmul.u32 %v83, %v85
  %v88 = vmul.u32 %v83, %v86
  %v89 = vmul.u32 %v84, %v85
  %v90 = vmul.u32 %v84, %v86
  %v91 = vshll.u32 %v88, 16
  %v92 = vshrl.u32 %v88, 16
  %v93 = vshll.u32 %v89, 16
  %v94 = vshrl.u32 %v89, 16
  %vm95 = vc.u32 %v87, %v91
  %v96 = vsel %vm95, 1, 0
  %v97 = vadd.s32 %v87, %v91
  %v98 = vadd.s32 %v90, %v96
  %vm99 = vc.u32 %v97, %v93
  %v100 = vsel %vm99, 1, 0
  %v101 = vadd.s32 %v97, %v93
  %v102 = vadd.s32 %v98, %v100
  %v103 = vadd.s32 %v102, %v92
  %v104 = vadd.s32 %v103, %v94
  %v105 = vmul.u32 %v60, %v51
  %v106 = vadd.s32 %v82, %v101
  %vm107 = vc.u32 %v82, %v101
  %v108 = vadd.s32 %v104, 1
  %v109 = vsel %vm107, %v108, %v104
  %v110 = vadd.s32 %v105, %v109
  %v111 = vadd.s32 %v110, 536870912
  %v112 = vshrl.u32 %v111, 30
  %v113 = vshll.u32 %v112, 30
  %v114 = vsub.s32 %v110, %v113
  %vm115 = vcmp.lt.s32.totalorder %v114, 0
  %v116 = vsub.s32 0, %v114
  %v117 = vsel %vm115, %v116, %v114
  %v118 = vclz %v117
  %v119 = vsub.s32 %v118, 2
  %vm120 = vcmp.gt.s32.totalorder 0, %v119
  %v121 = vsel %vm120, 0, %v119
  %v122 = vsub.s32 32, %v121
  %v123 = vshll.u32 %v114, %v121
  %v124 = vshrl.u32 %v106, %v122
  %v125 = vor.u32 %v123, %v124
  %v126 = vsub.s32 4294967266, %v121
  %v127 = vadd.s32 %v126, 127
  %v128 = vshll.u32 %v127, 23
  %v129 = vor.u32 4788187, %v128
  %v130 = vand.u32 2147483647, %v129
  %v132 = vcvt.s32.f32 %v125
  %v133 = vmul.f32 %v132, %v130
  %v134 = vxor.u32 %v133, 2147483648
  %v135 = vsel %vm14, %v134, %v133
  %v136 = vsub.s32 4, %v112
  %v137 = vsel %vm14, %v136, %v112
  %v138 = vsel %vm13, %v10, %v135
  %v139 = vsel %vm13, 0, %v137
  %v140 = vmul.f32 %v138, %v138
  %v141 = vmul.f32 %v140, -0.001358992
  %v142 = vadd.f32 %v141, 0.041655596
  %v143 = vmul.f32 %v140, %v142
  %v144 = vadd.f32 %v143, -0.4999988
  %v145 = vmul.f32 %v140, %v144
  %v146 = vadd.f32 1.0, %v145
  %v147 = vmul.f32 %v138, %v138
  %v148 = vmul.f32 %v147, -0.00019511016
  %v149 = vadd.f32 %v148, 0.008332121
  %v150 = vmul.f32 %v147, %v149
  %v151 = vadd.f32 %v150, -0.16666654
  %v152 = vmul.f32 %v147, %v151
  %v153 = vadd.f32 %v152, 1.0
  %v154 = vmul.f32 %v153, %v138
  %vm155 = vweird.f32 %v10
  %v156 = vand.u32 %v139, 3
  %vm157 = vcmp.lt.s32.totalorder %v156, 2
  %vm158 = vcmp.eq.s32.totalorder %v156, 0
  %v159 = vxor.u32 %v154, 2147483648
  %v160 = vsel %vm158, %v146, %v159
  %vm161 = vcmp.eq.s32.totalorder %v156, 2
  %v162 = vxor.u32 %v146, 2147483648
  %v163 = vsel %vm161, %v162, %v154
  %v164 = vsel %vm157, %v160, %v163
  %v165 = vsel %vm155, nan, %v164
  %v166 = vand.u32 2147483647, %v11
  %vm167 = vcmp.le.f32.partialorder %v166, 0.7853982
  %vm168 = vcmp.lt.s32.totalorder %v11, 0
  %v169 = vand.u32 %v11, 2139095040
  %v170 = vshrl.u32 %v169, 23
  %v171 = vsub.s32 %v170, 127
  %v172 = vand.u32 2147483647, %v11
  %v173 = vand.u32 %v172, 8388607
  %v174 = vor.u32 %v173, 8388608
  %v175 = vsub.s32 0, %v174
  %v176 = vadd.s32 %v171, 1
  %vm177 = vcmp.gt.s32.totalorder %v176, 0
  %v178 = vsel %vm177, %v176, 0
  %v179 = vshrl.u32 %v178, 5
  %v180 = vand.u32 %v178, 31
  %v181 = vsub.s32 32, %v180
  %v182 = vshrl.u32 683565275, %v181
  %v183 = vshll.u32 683565275, %v180
  %v184 = vshrl.u32 2475754826, %v181
  %v185 = vor.u32 %v183, %v184
  %v186 = vshll.u32 2475754826, %v180
  %v187 = vshrl.u32 2131351028, %v181
  %v188 = vor.u32 %v186, %v187
  %v189 = vshll.u32 2131351028, %v180
  %v190 = vshrl.u32 2102212464, %v181
  %v191 = vor.u32 %v189, %v190
  %v192 = vshll.u32 2102212464, %v180
  %v193 = vshrl.u32 920167782, %v181
  %v194 = vor.u32 %v192, %v193
  %v195 = vshll.u32 920167782, %v180
  %v196 = vshrl.u32 1326507024, %v181
  %v197 = vor.u32 %v195, %v196
  %vm198 = vcmp.lt.s32.totalorder %v179, 1
  %vm199 = vcmp.lt.s32.totalorder %v179, 2
  %vm200 = vcmp.lt.s32.totalorder %v179, 3
  %vm201 = vcmp.lt.s32.totalorder %v179, 4
  %v202 = vsel %vm198, %v182, %v185
  %v203 = vsel %vm201, %v191, 2102212464
  %v204 = vsel %vm200, %v188, %v203
  %v205 = vsel %vm199, %v202, %v204
  %v206 = vsel %vm198, %v185, %v188
  %v207 = vsel %vm201, %v194, 920167782
  %v208 = vsel %vm200, %v191, %v207
  %v209 = vsel %vm199, %v206, %v208
  %v210 = vsel %vm198, %v188, %v191
  %v211 = vsel %vm201, %v197, 1326507024
  %v212 = vsel %vm200, %v194, %v211
  %v213 = vsel %vm199, %v210, %v212
  %v214 = vshll.u32 %v174, 8
  %v215 = vand.u32 %v214, 65535
  %v216 = vshrl.u32 %v214, 16
  %v217 = vand.u32 %v213, 65535
  %v218 = vshrl.u32 %v213, 16
  %v219 = vmul.u32 %v215, %v217
  %v220 = vmul.u32 %v215, %v218
  %v221 = vmul.u32 %v216, %v217
  %v222 = vmul.u32 %v216, %v218
  %v223 = vshll.u32 %v220, 16
  %v224 = vshrl.u32 %v220, 16
  %v225 = vshll.u32 %v221, 16
  %v226 = vshrl.u32 %v221, 16
  %vm227 = vc.u32 %v219, %v223
  %v228 = vsel %vm227, 1, 0
  %v229 = vadd.s32 %v219, %v223
  %v230 = vadd.s32 %v222, %v228
  %vm231 = vc.u32 %v229, %v225
  %v232 = vsel %vm231, 1, 0
  %v233 = vadd.s32 %v229, %v225
  %v234 = vadd.s32 %v230, %v232
  %v235 = vadd.s32 %v234, %v224
  %v236 = vadd.s32 %v235, %v226
  %v237 = vand.u32 %v214, 65535
  %v238 = vshrl.u32 %v214, 16
  %v239 = vand.u32 %v209, 65535
  %v240 = vshrl.u32 %v209, 16
  %v241 = vmul.u32 %v237, %v239
  %v242 = vmul.u32 %v237, %v240
  %v243 = vmul.u32 %v238, %v239
  %v244 = vmul.u32 %v238, %v240
  %v245 = vshll.u32 %v242, 16
  %v246 = vshrl.u32 %v242, 16
  %v247 = vshll.u32 %v243, 16
  %v248 = vshrl.u32 %v243, 16
  %vm249 = vc.u32 %v241, %v245
  %v250 = vsel %vm249, 1, 0
  %v251 = vadd.s32 %v241, %v245
  %v252 = vadd.s32 %v244, %v250
  %vm253 = vc.u32 %v251, %v247
  %v254 = vsel %vm253, 1, 0
  %v255 = vadd.s32 %v251, %v247
  %v256 = vadd.s32 %v252, %v254
  %v257 = vadd.s32 %v256, %v246
  %v258 = vadd.s32 %v257, %v248
  %v259 = vmul.u32 %v214, %v205
  %v260 = vadd.s32 %v236, %v255
  %vm261 = vc.u32 %v236, %v255
  %v262 = vadd.s32 %v258, 1
  %v263 = vsel %vm261, %v262, %v258
  %v264 = vadd.s32 %v259, %v263
  %v265 = vadd.s32 %v264, 536870912
  %v266 = vshrl.u32 %v265, 30
  %v267 = vshll.u32 %v266, 30
  %v268 = vsub.s32 %v264, %v267
  %vm269 = vcmp.lt.s32.totalorder %v268, 0
  %v270 = vsub.s32 0, %v268
  %v271 = vsel %vm269, %v270, %v268
  %v272 = vclz %v271
  %v273 = vsub.s32 %v272, 2
  %vm274 = vcmp.gt.s32.totalorder 0, %v273
  %v275 = vsel %vm274, 0, %v273
  %v276 = vsub.s32 32, %v275
  %v277 = vshll.u32 %v268, %v275
  %v278 = vshrl.u32 %v260, %v276
  %v279 = vor.u32 %v277, %v278
  %v280 = vsub.s32 4294967266, %v275
  %v281 = vadd.s32 %v280, 127
  %v282 = vshll.u32 %v281, 23
  %v283 = vor.u32 4788187, %v282
  %v284 = vand.u32 2147483647, %v283
  %v286 = vcvt.s32.f32 %v279
  %v287 = vmul.f32 %v286, %v284
  %v288 = vxor.u32 %v287, 2147483648
  %v289 = vsel %vm168, %v288, %v287
  %v290 = vsub.s32 4, %v266
  %v291 = vsel %vm168, %v290, %v266
  %v292 = vsel %vm167, %v11, %v289
  %v293 = vsel %vm167, 0, %v291
  %v294 = vmul.f32 %v292, %v292
  %v295 = vmul.f32 %v294, -0.001358992
  %v296 = vadd.f32 %v295, 0.041655596
  %v297 = vmul.f32 %v294, %v296
  %v298 = vadd.f32 %v297, -0.4999988
  %v299 = vmul.f32 %v294, %v298
  %v300 = vadd.f32 1.0, %v299
  %v301 = vmul.f32 %v292, %v292
  %v302 = vmul.f32 %v301, -0.00019511016
  %v303 = vadd.f32 %v302, 0.008332121
  %v304 = vmul.f32 %v301, %v303
  %v305 = vadd.f32 %v304, -0.16666654
  %v306 = vmul.f32 %v301, %v305
  %v307 = vadd.f32 %v306, 1.0
  %v308 = vmul.f32 %v307, %v292
  %vm309 = vweird.f32 %v11
  %v310 = vand.u32 %v293, 3
  %vm311 = vcmp.lt.s32.totalorder %v310, 2
  %vm312 = vcmp.eq.s32.totalorder %v310, 0
  %v313 = vxor.u32 %v308, 2147483648
  %v314 = vsel %vm312, %v300, %v313
  %vm315 = vcmp.eq.s32.totalorder %v310, 2
  %v316 = vxor.u32 %v300, 2147483648
  %v317 = vsel %vm315, %v316, %v308
  %v318 = vsel %vm311, %v314, %v317
  %v319 = vsel %vm309, nan, %v318
  %v320 = vmul.f32 %v8, %v165
  %v321 = vmul.f32 %v9, %v319
  %v322 = vmul.f32 %v320, %v320
  %v323 = vmul.f32 %v321, %v321
  %326 = vst [vmem:[#allocation1] ss:$4 sm:$0xff] %v322
  %s327 = scalar_lea.vmem [#allocation1], 32
  %328 = vst [vmem:[%s327] ss:$4 sm:$0xff] %v323
  %v329 = vld.sshfl [vmem:[#allocation1] sm:$0xff pattern:$0x73625140]
  %v330 = vld.sshfl [vmem:[#allocation1 + $0x8] sm:$0xff pattern:$0x73625140]
  %v331 = vld.sshfl [vmem:[#allocation1 + $0x10] sm:$0xff pattern:$0x73625140]
  %v332 = vld.sshfl [vmem:[#allocation1 + $0x18] sm:$0xff pattern:$0x73625140]
  %v333 = vld.sshfl [vmem:[#allocation1 + $0x20] sm:$0xff pattern:$0x73625140]
  %v334 = vld.sshfl [vmem:[#allocation1 + $0x28] sm:$0xff pattern:$0x73625140]
  %v335 = vld.sshfl [vmem:[#allocation1 + $0x30] sm:$0xff pattern:$0x73625140]
  %v336 = vld.sshfl [vmem:[#allocation1 + $0x38] sm:$0xff pattern:$0x73625140]
  %vm345 = vcmask 1041408
  %v346 = vsel %vm345, %v329, 0.0
  %v347 = vrot.slane %v346, 4
  %v348 = vadd.f32 %v346, %v347
  %v349 = vrot.slane %v348, 2
  %v350 = vadd.f32 %v348, %v349
  %v351 = vrot.slane %v350, 1
  %v352 = vadd.f32 %v350, %v351
  %v353 = vsel %vm345, %v330, 0.0
  %v354 = vrot.slane %v353, 4
  %v355 = vadd.f32 %v353, %v354
  %v356 = vrot.slane %v355, 2
  %v357 = vadd.f32 %v355, %v356
  %v358 = vrot.slane %v357, 1
  %v359 = vadd.f32 %v357, %v358
  %v360 = vsel %vm345, %v331, 0.0
  %v361 = vrot.slane %v360, 4
  %v362 = vadd.f32 %v360, %v361
  %v363 = vrot.slane %v362, 2
  %v364 = vadd.f32 %v362, %v363
  %v365 = vrot.slane %v364, 1
  %v366 = vadd.f32 %v364, %v365
  %v367 = vsel %vm345, %v332, 0.0
  %v368 = vrot.slane %v367, 4
  %v369 = vadd.f32 %v367, %v368
  %v370 = vrot.slane %v369, 2
  %v371 = vadd.f32 %v369, %v370
  %v372 = vrot.slane %v371, 1
  %v373 = vadd.f32 %v371, %v372
  %v374 = vsel %vm345, %v333, 0.0
  %v375 = vrot.slane %v374, 4
  %v376 = vadd.f32 %v374, %v375
  %v377 = vrot.slane %v376, 2
  %v378 = vadd.f32 %v376, %v377
  %v379 = vrot.slane %v378, 1
  %v380 = vadd.f32 %v378, %v379
  %v381 = vsel %vm345, %v334, 0.0
  %v382 = vrot.slane %v381, 4
  %v383 = vadd.f32 %v381, %v382
  %v384 = vrot.slane %v383, 2
  %v385 = vadd.f32 %v383, %v384
  %v386 = vrot.slane %v385, 1
  %v387 = vadd.f32 %v385, %v386
  %v388 = vsel %vm345, %v335, 0.0
  %v389 = vrot.slane %v388, 4
  %v390 = vadd.f32 %v388, %v389
  %v391 = vrot.slane %v390, 2
  %v392 = vadd.f32 %v390, %v391
  %v393 = vrot.slane %v392, 1
  %v394 = vadd.f32 %v392, %v393
  %v395 = vsel %vm345, %v336, 0.0
  %v396 = vrot.slane %v395, 4
  %v397 = vadd.f32 %v395, %v396
  %v398 = vrot.slane %v397, 2
  %v399 = vadd.f32 %v397, %v398
  %v400 = vrot.slane %v399, 1
  %v401 = vadd.f32 %v399, %v400
  %v410 = vrot.slane %v359, 7
  %v411 = vrot.slane %v366, 6
  %v412 = vrot.slane %v373, 5
  %v413 = vrot.slane %v380, 4
  %v414 = vrot.slane %v387, 3
  %v415 = vrot.slane %v394, 2
  %v416 = vrot.slane %v401, 1
  %vm417 = vcmask 1040384
  %v418 = vsel %vm417, %v352, %v410
  %vm419 = vcmask 1042434
  %v420 = vsel %vm419, %v411, %v412
  %v421 = vsel %vm345, %v418, %v420
  %vm422 = vcmask 1044484
  %v423 = vsel %vm422, %v413, %v414
  %vm424 = vcmask 1046534
  %v425 = vsel %vm424, %v415, %v416
  %vm426 = vcmask 1045508
  %v427 = vsel %vm426, %v423, %v425
  %vm428 = vcmask 1043456
  %v429 = vsel %vm428, %v421, %v427
  %431 = vst [vmem:[%s1] sm:$0xff] %v429
  // Predicated region
  $region6: #{_spiral_gate_impl.2} parent=0 // pred_check
    _
  $region7: #{_spiral_gate_impl.2} parent=0 // pred_check_branch
    %433 = sbr.rel (0) target = $region9
  $region8: #{_spiral_gate_impl.2} parent=0 // pred_region
    _
  $region9: #{_spiral_gate_impl.2} parent=0 // pred_fallthru
    _
  // Predicated region
  $region10: #{_spiral_gate_impl.2} parent=0 // pred_check
    _
  $region11: #{_spiral_gate_impl.2} parent=0 // pred_check_branch
    %435 = sbr.rel (0) target = $region13
  $region12: #{_spiral_gate_impl.2} parent=0 // pred_region
    _
  $region13: #{_spiral_gate_impl.2} parent=0 // pred_fallthru
    _

</llo_original>
